<compile_context>
chip_gen: v7x
topology: tpu7x:2x2x1
jax: 0.10.0
libtpu: 0.0.40
codegen_flags: <defaults>
</compile_context>

<pallas_src>
import functools
import math

import jax
import jax.numpy as jnp
from jax import lax
from jax.experimental import pallas as pl
from jax.experimental.pallas import tpu as pltpu


# ----------------------------------------------------------------------------
# helpers
# ----------------------------------------------------------------------------
def _layernorm(x, gamma, beta, eps=1e-5):
    # PyTorch nn.LayerNorm over the last dim (biased variance, eps=1e-5).
    mu = jnp.mean(x, axis=-1, keepdims=True)
    var = jnp.mean((x - mu) ** 2, axis=-1, keepdims=True)
    return (x - mu) * lax.rsqrt(var + eps) * gamma + beta


def _cdiv(a, b):
    return (a + b - 1) // b


def _round_up(n, m):
    return _cdiv(n, m) * m


def _node_pad(n):
    # small node sets: pad to sublane multiple; large: pad to a 128-row tile.
    return _round_up(n, 8) if n <= 128 else _round_up(n, 128)


def _pad_rows(x, rows):
    if rows == x.shape[0]:
        return x
    return jnp.pad(x, ((0, rows - x.shape[0]), (0, 0)))


# ----------------------------------------------------------------------------
# kernel 1: node LayerNorm + Linear projection (used for K/V fused and for Q)
# ----------------------------------------------------------------------------
def _node_proj_kernel(x_ref, g_ref, b_ref, w_ref, o_ref):
    x = x_ref[...].astype(jnp.float32)
    xn = _layernorm(x, g_ref[...], b_ref[...])            # f32 elementwise
    o_ref[...] = jnp.dot(xn.astype(jnp.bfloat16), w_ref[...],
                         preferred_element_type=jnp.float32
                         ).astype(jnp.bfloat16)


def _node_project(x, g, b, w, tile):
    n_pad, hidden = x.shape
    out_dim = w.shape[1]
    return pl.pallas_call(
        _node_proj_kernel,
        out_shape=jax.ShapeDtypeStruct((n_pad, out_dim), jnp.bfloat16),
        grid=(n_pad // tile,),
        in_specs=[
            pl.BlockSpec((tile, hidden), lambda i: (i, 0)),
            pl.BlockSpec((1, hidden), lambda i: (0, 0)),
            pl.BlockSpec((1, hidden), lambda i: (0, 0)),
            pl.BlockSpec((hidden, out_dim), lambda i: (0, 0)),
        ],
        out_specs=pl.BlockSpec((tile, out_dim), lambda i: (i, 0)),
        compiler_params=pltpu.CompilerParams(
            dimension_semantics=("parallel",)),
    )(x, g, b, w)


# ----------------------------------------------------------------------------
# kernel 2: edge attention (gather -> per-head scores -> online segment
#           softmax -> scatter-add).  Grid over edge tiles ("arbitrary",
#           accumulating into a resident (hidden, No) output block).
# ----------------------------------------------------------------------------
def _edge_attn_kernel(row_ref, col_ref, ea_ref, q_ref, kv_ref,
                      ge_ref, be_ref, ge2_ref, be2_ref, we_ref,
                      acc_ref, m_ref, l_ref, *, heads, scale):
    f32 = jnp.float32
    bf16 = jnp.bfloat16
    t = pl.program_id(0)
    n_tiles = pl.num_programs(0)
    te = row_ref.shape[0]
    ns_pad = kv_ref.shape[0]
    no_pad = q_ref.shape[0]
    hidden = q_ref.shape[1]
    dh = hidden // heads

    @pl.when(t == 0)
    def _init():
        acc_ref[...] = jnp.zeros_like(acc_ref)
        m_ref[...] = jnp.full_like(m_ref, -1e30)
        l_ref[...] = jnp.zeros_like(l_ref)

    # --- per-tile one-hot selectors built from streamed indices ------------
    # (padded edges carry out-of-range sentinels -> all-zero selector rows)
    row = row_ref[...]                                          # (TE, 1) int32
    col = col_ref[...]                                          # (TE, 1) int32
    src_bool = lax.broadcasted_iota(jnp.int32, (te, ns_pad), 1) == row
    dst_bool = lax.broadcasted_iota(jnp.int32, (te, no_pad), 1) == col
    src_bf = src_bool.astype(f32).astype(bf16)                  # (TE, Ns)
    dst_f = dst_bool.astype(f32)                                # (TE, No)
    dst_bf = dst_f.astype(bf16)

    # --- edge bias: norm_edge -> lin_edge(LayerNorm, Linear(edge_dim, heads))
    ea = ea_ref[...].astype(f32)
    ea = _layernorm(ea, ge_ref[...], be_ref[...])
    ea = _layernorm(ea, ge2_ref[...], be2_ref[...])
    edge_bias = jnp.dot(ea, we_ref[...], preferred_element_type=f32)  # (TE, h)

    # --- gather per-edge node projections (bf16 MXU, f32 accumulate) -------
    kv_j = jnp.dot(src_bf, kv_ref[...], preferred_element_type=f32)   # (TE,2H)
    k_j = kv_j[:, :hidden]
    v_j = kv_j[:, hidden:]
    q_i = jnp.dot(dst_bf, q_ref[...], preferred_element_type=f32)     # (TE, H)
    qk = q_i * k_j                                                    # (TE, H)

    # --- per-head online segment softmax (per-target-node running max) -----
    m_all = m_ref[...]                                                # (h, No)
    l_all = l_ref[...]
    m_rows, l_rows, c_rows, p_cols = [], [], [], []
    for h in range(heads):
        s_h = (jnp.sum(qk[:, h * dh:(h + 1) * dh], axis=1, keepdims=True)
               * scale + edge_bias[:, h:h + 1])                       # (TE, 1)
        m_old = m_all[h:h + 1, :]                                     # (1, No)
        tile_max = jnp.max(jnp.where(dst_bool, s_h, -1e30),
                           axis=0, keepdims=True)                     # (1, No)
        m_new = jnp.maximum(m_old, tile_max)
        c_h = jnp.exp(m_old - m_new)                                  # (1, No)
        m_e = jnp.sum(dst_f * m_new, axis=1, keepdims=True)           # (TE, 1)
        p_h = jnp.exp(s_h - m_e)                                      # (TE, 1)
        d_h = jnp.sum(dst_f * p_h, axis=0, keepdims=True)             # (1, No)
        m_rows.append(m_new)
        l_rows.append(c_h * l_all[h:h + 1, :] + d_h)
        c_rows.append(c_h)
        p_cols.append(p_h)
    m_ref[...] = jnp.concatenate(m_rows, axis=0)
    l_ref[...] = jnp.concatenate(l_rows, axis=0)

    # broadcast per-head weights across their channel blocks (VPU work)
    c_full = jnp.concatenate(
        [jnp.broadcast_to(c_rows[h], (dh, no_pad)) for h in range(heads)],
        axis=0)                                                       # (H, No)
    p_full = jnp.concatenate(
        [jnp.broadcast_to(p_cols[h], (te, dh)) for h in range(heads)],
        axis=1)                                                       # (TE, H)

    weighted = (v_j * p_full).astype(bf16)                            # (TE, H)
    # scatter-add over target nodes: (H, No) += weighted^T @ dst_sel
    scat = lax.dot_general(weighted, dst_bf, (((0,), (0,)), ((), ())),
                           preferred_element_type=f32)                # (H, No)
    acc_ref[...] = acc_ref[...] * c_full + scat

    @pl.when(t == n_tiles - 1)
    def _finalize():
        inv_l = pl.reciprocal(l_ref[...] + 1e-16, approx=True)        # (h, No)
        inv_full = jnp.concatenate(
            [jnp.broadcast_to(inv_l[h:h + 1, :], (dh, no_pad))
             for h in range(heads)], axis=0)                          # (H, No)
        acc_ref[...] = acc_ref[...] * inv_full


def _edge_attention(row2d, col2d, ea, q, kv, ge, be, ge2, be2, we,
                    heads, edge_tile):
    e_pad = row2d.shape[0]
    no_pad, hidden = q.shape
    ns_pad = kv.shape[0]
    edge_dim = ea.shape[1]
    n_tiles = e_pad // edge_tile
    scale = 1.0 / math.sqrt(hidden // heads)
    kernel = functools.partial(_edge_attn_kernel, heads=heads, scale=scale)
    return pl.pallas_call(
        kernel,
        out_shape=jax.ShapeDtypeStruct((hidden, no_pad), jnp.float32),
        grid=(n_tiles,),
        in_specs=[
            pl.BlockSpec((edge_tile, 1), lambda t: (t, 0)),
            pl.BlockSpec((edge_tile, 1), lambda t: (t, 0)),
            pl.BlockSpec((edge_tile, edge_dim), lambda t: (t, 0)),
            pl.BlockSpec((no_pad, hidden), lambda t: (0, 0)),
            pl.BlockSpec((ns_pad, 2 * hidden), lambda t: (0, 0)),
            pl.BlockSpec((1, edge_dim), lambda t: (0, 0)),
            pl.BlockSpec((1, edge_dim), lambda t: (0, 0)),
            pl.BlockSpec((1, edge_dim), lambda t: (0, 0)),
            pl.BlockSpec((1, edge_dim), lambda t: (0, 0)),
            pl.BlockSpec((edge_dim, heads), lambda t: (0, 0)),
        ],
        out_specs=pl.BlockSpec((hidden, no_pad), lambda t: (0, 0)),
        scratch_shapes=[
            pltpu.VMEM((heads, no_pad), jnp.float32),   # running segment max
            pltpu.VMEM((heads, no_pad), jnp.float32),   # running exp-sum
        ],
        compiler_params=pltpu.CompilerParams(
            dimension_semantics=("arbitrary",),
            vmem_limit_bytes=32 * 1024 * 1024,
        ),
    )(row2d, col2d, ea, q, kv, ge, be, ge2, be2, we)


# ----------------------------------------------------------------------------
# kernel 3: sigmoid gate + residual (re-derives LayerNorm(x_out) in-kernel)
# ----------------------------------------------------------------------------
def _gate_residual_kernel(x_ref, g_ref, b_ref, m_ref, wx_ref, wm_ref,
                          bias_ref, o_ref):
    f32 = jnp.float32
    bf16 = jnp.bfloat16
    x = x_ref[...].astype(f32)
    xn = _layernorm(x, g_ref[...], b_ref[...])              # cheap recompute
    m = m_ref[...]
    logit = (jnp.dot(xn.astype(bf16), wx_ref[...], preferred_element_type=f32)
             + jnp.dot(m.astype(bf16), wm_ref[...], preferred_element_type=f32)
             + bias_ref[...])
    gate = pl.reciprocal(1.0 + jnp.exp(-logit), approx=True)   # sigmoid (EUP)
    o_ref[...] = (x + gate * m).astype(o_ref.dtype)


def _gate_residual(x_out, g, b, m_agg, wx, wm, bias, tile):
    no_pad, hidden = x_out.shape
    return pl.pallas_call(
        _gate_residual_kernel,
        out_shape=jax.ShapeDtypeStruct((no_pad, hidden), x_out.dtype),
        grid=(no_pad // tile,),
        in_specs=[
            pl.BlockSpec((tile, hidden), lambda i: (i, 0)),
            pl.BlockSpec((1, hidden), lambda i: (0, 0)),
            pl.BlockSpec((1, hidden), lambda i: (0, 0)),
            pl.BlockSpec((tile, hidden), lambda i: (i, 0)),
            pl.BlockSpec((hidden, hidden), lambda i: (0, 0)),
            pl.BlockSpec((hidden, hidden), lambda i: (0, 0)),
            pl.BlockSpec((1, hidden), lambda i: (0, 0)),
        ],
        out_specs=pl.BlockSpec((tile, hidden), lambda i: (i, 0)),
        compiler_params=pltpu.CompilerParams(
            dimension_semantics=("parallel",)),
    )(x_out, g, b, m_agg, wx, wm, bias)


# ----------------------------------------------------------------------------
# full forward
# ----------------------------------------------------------------------------
def residual_cross_attention_block(x_source, x_out, edge_index, edge_attr,
                                   params, heads, *, edge_tile=128):
    """Forward of ResidualCrossAttentionBlock (geometric=False, dropout=0.0).

    Returns (x_out_new, p_out) with p_out = None (non-geometric path).
    """
    ns, hidden = x_source.shape
    no, _ = x_out.shape
    e, _ = edge_attr.shape

    ns_pad = _node_pad(ns)
    no_pad = _node_pad(no)
    e_pad = _round_up(max(e, 1), edge_tile)
    tile_s = min(128, ns_pad)
    tile_o = min(128, no_pad)

    xs_p = _pad_rows(x_source, ns_pad)
    xo_p = _pad_rows(x_out, no_pad)
    ea_p = _pad_rows(edge_attr, e_pad)

    row = edge_index[0].astype(jnp.int32)   # source node per edge (j)
    col = edge_index[1].astype(jnp.int32)   # target node per edge (i)
    # padded edges point at out-of-range sentinels -> zero selector rows.
    row_p = jnp.concatenate(
        [row, jnp.full((e_pad - e,), ns_pad, jnp.int32)]).reshape(e_pad, 1)
    col_p = jnp.concatenate(
        [col, jnp.full((e_pad - e,), no_pad, jnp.int32)]).reshape(e_pad, 1)

    # fused K/V weight; bf16 at the MXU boundary only.
    w_kv = jnp.concatenate([params["wk"], params["wv"]], axis=1
                           ).astype(jnp.bfloat16)
    w_q = params["wq"].astype(jnp.bfloat16)
    gate_wx = params["gate_wx"].astype(jnp.bfloat16)
    gate_wm = params["gate_wm"].astype(jnp.bfloat16)

    kv = _node_project(xs_p, params["g_src"], params["b_src"], w_kv, tile_s)
    q = _node_project(xo_p, params["g_out"], params["b_out"], w_q, tile_o)

    m_agg_t = _edge_attention(row_p, col_p, ea_p, q, kv,
                              params["g_edge"], params["b_edge"],
                              params["g_edge2"], params["b_edge2"],
                              params["w_edge"], heads, edge_tile)
    m_agg = m_agg_t.T   # (no_pad, hidden) - small layout glue outside kernels

    out_p = _gate_residual(xo_p, params["g_out"], params["b_out"], m_agg,
                           gate_wx, gate_wm, params["gate_b"], tile_o)
    return out_p[:no], None  # p_out is None when geometric=False


# ----------------------------------------------------------------------------
# synthetic parameters + pure-JAX reference (correctness check)
# ----------------------------------------------------------------------------
def init_params(key, hidden, heads, edge_dim):
    """Synthetic params.  NOTE: Linear weights stored as (in, out); real
    PyTorch checkpoints (out, in) must be transposed when loaded."""
    k1, k2, k3, k4, k5, k6 = jax.random.split(key, 6)
    f32 = jnp.float32
    return {
        "g_src": jnp.ones((1, hidden), f32), "b_src": jnp.zeros((1, hidden), f32),
        "g_out": jnp.ones((1, hidden), f32), "b_out": jnp.zeros((1, hidden), f32),
        "g_edge": jnp.ones((1, edge_dim), f32), "b_edge": jnp.zeros((1, edge_dim), f32),
        "g_edge2": jnp.ones((1, edge_dim), f32), "b_edge2": jnp.zeros((1, edge_dim), f32),
        "wq": 0.1 * jax.random.normal(k1, (hidden, hidden), f32),
        "wk": 0.1 * jax.random.normal(k2, (hidden, hidden), f32),
        "wv": 0.1 * jax.random.normal(k3, (hidden, hidden), f32),
        "w_edge": 0.1 * jax.random.normal(k4, (edge_dim, heads), f32),
        # PyTorch init is W=0, b=1 (gate_linear_init_weights); use small random
        # weights here so the gate matmul path is actually exercised.
        "gate_wx": 0.1 * jax.random.normal(k5, (hidden, hidden), f32),
        "gate_wm": 0.1 * jax.random.normal(k6, (hidden, hidden), f32),
        "gate_b": jnp.ones((1, hidden), f32),
    }


def _reference(x_source, x_out, edge_index, edge_attr, params, heads):
    def ln(x, g, b, eps=1e-5):
        mu = x.mean(-1, keepdims=True)
        var = ((x - mu) ** 2).mean(-1, keepdims=True)
        return (x - mu) / jnp.sqrt(var + eps) * g + b

    hidden = x_source.shape[1]
    no = x_out.shape[0]
    dh = hidden // heads
    row, col = edge_index[0], edge_index[1]
    xs_n = ln(x_source, params["g_src"], params["b_src"])
    xo_n = ln(x_out, params["g_out"], params["b_out"])
    ea = ln(edge_attr, params["g_edge"], params["b_edge"])
    ea = ln(ea, params["g_edge2"], params["b_edge2"])
    edge_bias = ea @ params["w_edge"]
    q = (xo_n @ params["wq"])[col].reshape(-1, heads, dh)
    k = (xs_n @ params["wk"])[row].reshape(-1, heads, dh)
    v = (xs_n @ params["wv"])[row].reshape(-1, heads, dh)
    alpha = (q * k).sum(-1) / math.sqrt(dh) + edge_bias
    seg_max = jax.ops.segment_max(alpha, col, num_segments=no)
    ex = jnp.exp(alpha - seg_max[col])
    denom = jax.ops.segment_sum(ex, col, num_segments=no)
    alpha_n = ex / (denom[col] + 1e-16)
    m = (v * alpha_n[..., None]).reshape(-1, hidden)
    m_agg = jax.ops.segment_sum(m, col, num_segments=no)
    gate = jax.nn.sigmoid(xo_n @ params["gate_wx"]
                          + m_agg @ params["gate_wm"] + params["gate_b"])
    return x_out + gate * m_agg


if __name__ == "__main__":
    hidden, heads, edge_dim = 32, 4, 8
    n_src, n_out, n_edges = 16, 8, 300   # 3 edge tiles of 128 (exercises the
                                         # init / accumulate / finalize path)

    key = jax.random.PRNGKey(0)
    kx, ko, ke, kr, kc, kp = jax.random.split(key, 6)

    x_source = jax.random.normal(kx, (n_src, hidden), jnp.float32)
    x_out = jax.random.normal(ko, (n_out, hidden), jnp.float32)
    cross_edge_attr = jax.random.normal(ke, (n_edges, edge_dim), jnp.float32)
    cross_edge_index = jnp.stack([
        jax.random.randint(kr, (n_edges,), 0, n_src),   # source nodes (j)
        jax.random.randint(kc, (n_edges,), 0, n_out),   # target nodes (i)
    ]).astype(jnp.int32)

    params = init_params(kp, hidden, heads, edge_dim)

    x_out_new, p_out = residual_cross_attention_block(
        x_source, x_out, cross_edge_index, cross_edge_attr, params, heads)
    jax.block_until_ready(x_out_new)

    assert x_out_new.shape == (n_out, hidden)
    assert p_out is None  # non-geometric path returns p_out = None

    ref = _reference(x_source, x_out, cross_edge_index, cross_edge_attr,
                     params, heads)
    max_err = float(jnp.max(jnp.abs(x_out_new - ref)))
    assert max_err < 5e-2, f"mismatch vs reference: {max_err}"

    # TODO(synk): geometric=True path (boost/rotate, geometric encoder/decoder,
    # p update) is not implemented; this block covers geometric=False only.
    print("KERNEL_OK")
</pallas_src>

<mosaic_0001>
module attributes {stable_mosaic.version = 11 : i64} {
  func.func @_node_proj_kernel(%arg0: i32, %arg1: memref<16x32xf32, #tpu.memory_space<vmem>>, %arg2: memref<1x32xf32, #tpu.memory_space<vmem>>, %arg3: memref<1x32xf32, #tpu.memory_space<vmem>>, %arg4: memref<32x64xbf16, #tpu.memory_space<vmem>>, %arg5: memref<16x64xbf16, #tpu.memory_space<vmem>>) attributes {dimension_semantics = [#tpu.dimension_semantics<parallel>], iteration_bounds = array<i64: 1>, scalar_prefetch = 0 : i64, scratch_operands = 0 : i64, tpu.core_type = #tpu.core_type<tc>, window_params = [{transform_indices = @transform_0, window_bounds = array<i64: 16, 32>}, {pipeline_mode = #tpu.pipeline_mode<synchronous>, transform_indices = @transform_1, window_bounds = array<i64: 1, 32>}, {pipeline_mode = #tpu.pipeline_mode<synchronous>, transform_indices = @transform_2, window_bounds = array<i64: 1, 32>}, {pipeline_mode = #tpu.pipeline_mode<synchronous>, transform_indices = @transform_3, window_bounds = array<i64: 32, 64>}, {transform_indices = @transform_4, window_bounds = array<i64: 16, 64>}]} {
    %c0 = arith.constant 0 : index
    %c0_0 = arith.constant 0 : index
    %0 = vector.load %arg1[%c0, %c0_0] : memref<16x32xf32, #tpu.memory_space<vmem>>, vector<16x32xf32>
    %c0_1 = arith.constant 0 : index
    %c0_2 = arith.constant 0 : index
    %1 = vector.load %arg2[%c0_1, %c0_2] : memref<1x32xf32, #tpu.memory_space<vmem>>, vector<1x32xf32>
    %c0_3 = arith.constant 0 : index
    %c0_4 = arith.constant 0 : index
    %2 = vector.load %arg3[%c0_3, %c0_4] : memref<1x32xf32, #tpu.memory_space<vmem>>, vector<1x32xf32>
    %cst = arith.constant dense<0.000000e+00> : vector<16xf32>
    %3 = vector.multi_reduction <add>, %0, %cst [1] : vector<16x32xf32> to vector<16xf32>
    %4 = vector.shape_cast %3 : vector<16xf32> to vector<16x1xf32>
    %cst_5 = arith.constant 3.200000e+01 : f32
    %5 = vector.broadcast %cst_5 : f32 to vector<16x1xf32>
    %6 = arith.divf %4, %5 : vector<16x1xf32>
    %7 = vector.broadcast %6 : vector<16x1xf32> to vector<16x32xf32>
    %8 = arith.subf %0, %7 : vector<16x32xf32>
    %9 = arith.mulf %8, %8 : vector<16x32xf32>
    %cst_6 = arith.constant dense<0.000000e+00> : vector<16xf32>
    %10 = vector.multi_reduction <add>, %9, %cst_6 [1] : vector<16x32xf32> to vector<16xf32>
    %11 = vector.shape_cast %10 : vector<16xf32> to vector<16x1xf32>
    %cst_7 = arith.constant 3.200000e+01 : f32
    %12 = vector.broadcast %cst_7 : f32 to vector<16x1xf32>
    %13 = arith.divf %11, %12 : vector<16x1xf32>
    %14 = vector.broadcast %6 : vector<16x1xf32> to vector<16x32xf32>
    %15 = arith.subf %0, %14 : vector<16x32xf32>
    %cst_8 = arith.constant 9.99999974E-6 : f32
    %16 = vector.broadcast %cst_8 : f32 to vector<16x1xf32>
    %17 = arith.addf %13, %16 : vector<16x1xf32>
    %18 = math.rsqrt %17 : vector<16x1xf32>
    %19 = vector.broadcast %18 : vector<16x1xf32> to vector<16x32xf32>
    %20 = arith.mulf %15, %19 : vector<16x32xf32>
    %21 = vector.broadcast %1 : vector<1x32xf32> to vector<16x32xf32>
    %22 = arith.mulf %20, %21 : vector<16x32xf32>
    %23 = vector.broadcast %2 : vector<1x32xf32> to vector<16x32xf32>
    %24 = arith.addf %22, %23 : vector<16x32xf32>
    %25 = arith.truncf %24 : vector<16x32xf32> to vector<16x32xbf16>
    %c0_9 = arith.constant 0 : index
    %c0_10 = arith.constant 0 : index
    %26 = vector.load %arg4[%c0_9, %c0_10] : memref<32x64xbf16, #tpu.memory_space<vmem>>, vector<32x64xbf16>
    %cst_11 = arith.constant dense<0.000000e+00> : vector<16x64xf32>
    %27 = tpu.matmul %25, %26, %cst_11 {dimension_numbers = #tpu.dot_dimension_numbers<[1], [0], [0], [1], [0, 0, 1, 1], [], []>} : vector<16x32xbf16>, vector<32x64xbf16>, vector<16x64xf32> -> vector<16x64xf32>
    %28 = arith.truncf %27 : vector<16x64xf32> to vector<16x64xbf16>
    %c0_12 = arith.constant 0 : index
    %c0_13 = arith.constant 0 : index
    %29 = vector.load %arg5[%c0_12, %c0_13] : memref<16x64xbf16, #tpu.memory_space<vmem>>, vector<16x64xbf16>
    tpu.vector_store %arg5[%c0_12, %c0_13], %28 {strides = array<i32>} : memref<16x64xbf16, #tpu.memory_space<vmem>>, vector<16x64xbf16>,
    return
  }
  func.func @transform_0(%arg0: i32) -> (i32, i32) {
    %c0_i32 = arith.constant 0 : i32
    %c0_i32_0 = arith.constant 0 : i32
    return %arg0, %c0_i32 : i32, i32
  }
  func.func @transform_1(%arg0: i32) -> (i32, i32) {
    %c0_i32 = arith.constant 0 : i32
    %c0_i32_0 = arith.constant 0 : i32
    %c0_i32_1 = arith.constant 0 : i32
    return %c0_i32, %c0_i32_0 : i32, i32
  }
  func.func @transform_2(%arg0: i32) -> (i32, i32) {
    %c0_i32 = arith.constant 0 : i32
    %c0_i32_0 = arith.constant 0 : i32
    %c0_i32_1 = arith.constant 0 : i32
    return %c0_i32, %c0_i32_0 : i32, i32
  }
  func.func @transform_3(%arg0: i32) -> (i32, i32) {
    %c0_i32 = arith.constant 0 : i32
    %c0_i32_0 = arith.constant 0 : i32
    %c0_i32_1 = arith.constant 0 : i32
    return %c0_i32, %c0_i32_0 : i32, i32
  }
  func.func @transform_4(%arg0: i32) -> (i32, i32) {
    %c0_i32 = arith.constant 0 : i32
    %c0_i32_0 = arith.constant 0 : i32
    return %arg0, %c0_i32 : i32, i32
  }
}

</mosaic_0001>

<llo_original>
// kernel: tpu_custom_call.1
$region0: #{tpu_custom_call.1}
  #allocation0 [shape = 'u32[]', space=smem, size = 0x4, offset = 0x4, fixed_abs, tag = 'smem constant byte address 0x4 - core index']
  #allocation1 [shape = 'u32[144,128]{1,0:T(1,128)}', space=vmem, size = 0x12000, scoped, tag = 'internal scratch']
  %s0 = inlined_call_operand.hbm [shape: f32[16,32], index: 0, kind: input, shape index: {}]
  %s1 = inlined_call_operand.vmem [shape: f32[1,32], index: 1, kind: input, shape index: {}]
  %s2 = inlined_call_operand.vmem [shape: f32[1,32], index: 2, kind: input, shape index: {}]
  %s3 = inlined_call_operand.hbm [shape: bf16[32,64], index: 3, kind: input, shape index: {}]
  %s4 = inlined_call_operand.hbm [shape: bf16[16,64], index: 4, kind: output, shape index: {}]
  %s5 = sld [smem:[#allocation0]]
  $region34: #{tpu_custom_call.1} parent=0
    _
  %s7 = ssub.s32 1, %s5
  %s8 = scalar_select 0, %s7, %s5
  $region1: #{tpu_custom_call.1} parent=0
    #allocation2 [shape = 'u8[8192]{0}', space=vmem, size = 0x2000, scoped, tag = 'input window, operand 0, single buffered']
    #allocation3 [shape = 's32[1]{0}', space=sflag, size = 0x4, scoped, tag = 'scoped memory for tpu_custom_call.1']
    #allocation4 [shape = 's32[1]{0}', space=sflag, size = 0x4, scoped, tag = 'scoped memory for tpu_custom_call.1']
    #allocation5 [shape = 'u8[8192]{0}', space=vmem, size = 0x2000, scoped, tag = 'input window, operand 3, single buffered']
    #allocation6 [shape = 's32[1]{0}', space=sflag, size = 0x4, scoped, tag = 'scoped memory for tpu_custom_call.1']
    #allocation7 [shape = 'u8[4096]{0}', space=vmem, size = 0x1000, scoped, tag = 'output window, operand 0, single buffered']
    %9 = vsyncpa [#allocation3], 0
    %10 = vsyncpa [#allocation6], 0
    %11 = vsyncpa [#allocation4], 0
    // Predicated region
    $region2: #{tpu_custom_call.1} parent=1 // pred_check
      _
    $region3: #{tpu_custom_call.1} parent=1 // pred_check_branch
      %13 = sbr.rel (0) target = $region5
    $region4: #{tpu_custom_call.1} parent=1 // pred_region
      %s15 = ssub.s32 256, 256
      %16 = vsyncadd [#allocation3], %s15
      %s17 = sshll.u32 [#allocation2], 4
      %s18 = int_to_ptr.vmem [resolvable:$true] %s17
      %23 = dma.hbm_to_vmem [thread:$0]  %s0, 256, %s18, [#allocation3], 128, 128, 8
    $region5: #{tpu_custom_call.1} parent=1 // pred_fallthru
      _
    // Predicated region
    $region6: #{tpu_custom_call.1} parent=1 // pred_check
      _
    $region7: #{tpu_custom_call.1} parent=1 // pred_check_branch
      %25 = sbr.rel (0) target = $region9
    $region8: #{tpu_custom_call.1} parent=1 // pred_region
      _
    $region9: #{tpu_custom_call.1} parent=1 // pred_fallthru
      _
    // Predicated region
    $region10: #{tpu_custom_call.1} parent=1 // pred_check
      _
    $region11: #{tpu_custom_call.1} parent=1 // pred_check_branch
      %27 = sbr.rel (0) target = $region13
    $region12: #{tpu_custom_call.1} parent=1 // pred_region
      _
    $region13: #{tpu_custom_call.1} parent=1 // pred_fallthru
      _
    // Predicated region
    $region14: #{tpu_custom_call.1} parent=1 // pred_check
      _
    $region15: #{tpu_custom_call.1} parent=1 // pred_check_branch
      %29 = sbr.rel (0) target = $region17
    $region16: #{tpu_custom_call.1} parent=1 // pred_region
      %s31 = ssub.s32 256, 256
      %32 = vsyncadd [#allocation6], %s31
      %s33 = sshll.u32 [#allocation5], 4
      %s34 = int_to_ptr.vmem [resolvable:$true] %s33
      %39 = dma.hbm_to_vmem [thread:$0]  %s3, 256, %s34, [#allocation6], 64, 64, 4
    $region17: #{tpu_custom_call.1} parent=1 // pred_fallthru
      _
    // Predicated region
    $region18: #{tpu_custom_call.1} parent=1 // pred_check
      _
    $region19: #{tpu_custom_call.1} parent=1 // pred_check_branch
      %41 = sbr.rel (0) target = $region21
    $region20: #{tpu_custom_call.1} parent=1 // pred_region
      %42 = dma.done [#allocation3], 256
    $region21: #{tpu_custom_call.1} parent=1 // pred_fallthru
      _
    // Predicated region
    $region22: #{tpu_custom_call.1} parent=1 // pred_check
      _
    $region23: #{tpu_custom_call.1} parent=1 // pred_check_branch
      %44 = sbr.rel (0) target = $region25
    $region24: #{tpu_custom_call.1} parent=1 // pred_region
      %45 = dma.done [#allocation6], 256
    $region25: #{tpu_custom_call.1} parent=1 // pred_fallthru
      _
    %v47 = vld [vmem:[#allocation2] sm:$0xff]
    %v48 = vld [vmem:[#allocation2 + $0x8] sm:$0xff]
    %v49 = vld [vmem:[%s1] sm:$0x1]
    %v50 = vld [vmem:[%s2] sm:$0x1]
    %vm51 = vcmask 261120
    %v52 = vsel %vm51, %v47, 0.0
    %53 = vadd.xlane.f32.xlu0 %v52
    %v54 = vpop.xlane.xlu0 %53
    %v55 = vsel %vm51, %v48, 0.0
    %56 = vadd.xlane.f32.xlu0 %v55
    %v57 = vpop.xlane.xlu0 %56
    %v58 = vrcp.pop 32.0
    %v59 = vmul.f32 %v54, %v58
    %v60 = vmul.f32 %v57, %v58
    %v61 = vsub.f32 %v47, %v59
    %v62 = vsub.f32 %v48, %v60
    %v63 = vmul.f32 %v61, %v61
    %v64 = vmul.f32 %v62, %v62
    %v65 = vsel %vm51, %v63, 0.0
    %66 = vadd.xlane.f32.xlu0 %v65
    %v67 = vpop.xlane.xlu0 %66
    %v68 = vsel %vm51, %v64, 0.0
    %69 = vadd.xlane.f32.xlu0 %v68
    %v70 = vpop.xlane.xlu0 %69
    %v71 = vmul.f32 %v67, %v58
    %v72 = vmul.f32 %v70, %v58
    %v73 = vadd.f32 %v71, 1e-05
    %v74 = vadd.f32 %v72, 1e-05
    %v75 = vrsqrt.pop %v73
    %v76 = vrsqrt.pop %v74
    %v77 = vmul.f32 %v61, %v75
    %v78 = vmul.f32 %v62, %v76
    %v80 = vlaneseq
    %v81 = vshrl.u32 %v80, 7
    %v82 = vsub.s32 0, %v81
    %v83 = vrot.slane %v49, %v82
    %v85 = vmul.f32 %v77, %v83
    %v86 = vmul.f32 %v78, %v83
    %v88 = vlaneseq
    %v89 = vshrl.u32 %v88, 7
    %v90 = vsub.s32 0, %v89
    %v91 = vrot.slane %v50, %v90
    %v93 = vadd.f32 %v85, %v91
    %v94 = vadd.f32 %v86, %v91
    %v95 = vpack.c.bf16 %v94, %v93
    %v96 = vld [vmem:[#allocation5] sm:$0xf]
    %v97 = vld [vmem:[#allocation5 + $0x4] sm:$0xf]
    %v98 = vld [vmem:[#allocation5 + $0x8] sm:$0xf]
    %v99 = vld [vmem:[#allocation5 + $0xc] sm:$0xf]
    %v104 = vunpack.c.l.b16 %v96
    %v105 = vunpack.c.l.b16 %v97
    %v106 = vunpack.c.l.b16 %v98
    %v107 = vunpack.c.l.b16 %v99
    %v108 = vpack.c.b16 %v105, %v104
    %v109 = vpack.c.b16 %v107, %v106
    %v113 = vsel %vm51, %v95, 0
    %115 = vmatprep.subr.bf16.mxu0 0
    %116 = vmatpush1.bf16.msra.mxu0 %v108
    %117 = vmatprep.subr.bf16.mxu0 0
    %118 = vmatpush1.bf16.msra.mxu0 %v109
    %119 = vmatprep.subr.bf16.mxu0 0
    %120 = vmatpush1.bf16.msra.mxu0 0
    %121 = vmatprep.subr.bf16.mxu0 0
    %122 = vmatpush1.bf16.msra.mxu0 0
    %123 = vmatprep.subr.bf16.mxu0 0
    %124 = vmatpush1.bf16.msra.mxu0 0
    %125 = vmatprep.subr.bf16.mxu0 0
    %126 = vmatpush1.bf16.msra.mxu0 0
    %127 = vmatprep.subr.bf16.mxu0 0
    %128 = vmatpush1.bf16.msra.mxu0 0
    %129 = vmatprep.subr.bf16.mxu0 0
    %130 = vmatpush1.bf16.msra.mxu0 0
    %131 = vmatprep.subr.bf16.mxu0 0
    %132 = vmatpush1.bf16.msra.mxu0 0
    %133 = vmatprep.subr.bf16.mxu0 0
    %134 = vmatpush1.bf16.msra.mxu0 0
    %135 = vmatprep.subr.bf16.mxu0 0
    %136 = vmatpush1.bf16.msra.mxu0 0
    %137 = vmatprep.subr.bf16.mxu0 0
    %138 = vmatpush1.bf16.msra.mxu0 0
    %139 = vmatprep.subr.bf16.mxu0 0
    %140 = vmatpush1.bf16.msra.mxu0 0
    %141 = vmatprep.subr.bf16.mxu0 0
    %142 = vmatpush1.bf16.msra.mxu0 0
    %143 = vmatprep.subr.bf16.mxu0 0
    %144 = vmatpush1.bf16.msra.mxu0 0
    %145 = vmatprep.subr.bf16.mxu0 0
    %146 = vmatpush1.bf16.msra.mxu0 0
    %147 = vmatprep.mubr.bf16.mxu0 0
    %148 = vmatmul.mubr.bf16.gmra.mrb[0].mxu0 %v113
    %v149 = vpop.f32.mrb[0].mxu0
    %v150 = vadd.f32 0.0, %v149
    %v151 = vpop.f32.mrb[0].mxu0
    %v152 = vpop.f32.mrb[0].mxu0
    %v153 = vadd.f32 0.0, %v152
    %v154 = vpop.f32.mrb[0].mxu0
    %155 = vdwg.mxu0
    %v156 = vpack.c.bf16 %v153, %v150
    %v158 = vunpack.c.l.b16 %v156
    %v159 = vunpack.c.h.b16 %v156
    %v160 = vpack.c.b16 %v158, %v158
    %v161 = vpack.c.b16 %v159, %v159
    %vm164 = vcmask 519168
    %165 = vst.msk [vmem:[#allocation7] sm:$0xf] %vm164, %v160
    %166 = vst.msk [vmem:[#allocation7 + $0x4] sm:$0xf] %vm164, %v161
    // Predicated region
    $region26: #{tpu_custom_call.1} parent=1 // pred_check
      _
    $region27: #{tpu_custom_call.1} parent=1 // pred_check_branch
      %168 = sbr.rel (0) target = $region29
    $region28: #{tpu_custom_call.1} parent=1 // pred_region
      %s170 = ssub.s32 128, 128
      %171 = vsyncadd [#allocation4], %s170
      %s172 = sshll.u32 [#allocation7], 4
      %s173 = int_to_ptr.vmem [resolvable:$true] %s172
      %178 = dma.vmem_to_hbm [thread:$0]  %s173, 128, %s4, [#allocation4], 64, 64, 4
    $region29: #{tpu_custom_call.1} parent=1 // pred_fallthru
      _
    // Predicated region
    $region30: #{tpu_custom_call.1} parent=1 // pred_check
      _
    $region31: #{tpu_custom_call.1} parent=1 // pred_check_branch
      %180 = sbr.rel (0) target = $region33
    $region32: #{tpu_custom_call.1} parent=1 // pred_region
      %181 = dma.done [#allocation4], 128
    $region33: #{tpu_custom_call.1} parent=1 // pred_fallthru
      _
    %182 = vsyncpa [#allocation3], 1
    %183 = vsyncpa [#allocation6], 1
    %184 = vsyncpa [#allocation4], 1

</llo_original>
